<compile_context>
chip_gen: v7x
topology: tpu7x:2x2x1
jax: 0.10.0
libtpu: 0.0.40
codegen_flags: <defaults>
</compile_context>

<pallas_src>
import functools

import jax
import jax.numpy as jnp
from jax.experimental import pallas as pl
from jax.experimental.pallas import tpu as pltpu


# ----------------------------------------------------------------------------
# Kernel 1: GAT projection  z = x @ Wfc (bf16 MXU, f32 acc) ;  elr = z @ [AR|AL]
# (AR / AL are block-diagonal packings of attn_r / attn_l so the per-head sums
#  run as one narrow MXU matmul with a single fused output.)
# ----------------------------------------------------------------------------
def _gat_project_kernel(x_ref, wfc_ref, alr_ref, z_ref, elr_ref):
    xb = x_ref[...].astype(jnp.bfloat16)
    z = jnp.dot(xb, wfc_ref[...], preferred_element_type=jnp.float32)   # (T, E) f32
    z_ref[...] = z.astype(jnp.bfloat16)                                  # bf16 to HBM
    # Logit projections kept in f32 (tiny (T,E)x(E,2H) matmul; precision matters
    # for the softmax downstream).
    elr_ref[...] = jnp.dot(z, alr_ref[...], preferred_element_type=jnp.float32)


# ----------------------------------------------------------------------------
# Kernel 2: per-destination-tile GAT attention + skip + BN + FFN skip + BN.
# ----------------------------------------------------------------------------
def _gat_ffn_kernel(x_ref, adjb_ref, er_ref, z_ref, elt_ref, gatb_ref,
                    bn1s_ref, bn1b_ref, w1_ref, b1_ref, w2_ref, b2_ref,
                    bn2s_ref, bn2b_ref, o_ref, acc_ref, *, n_heads, head_dim, slope):
    f32 = jnp.float32
    bf16 = jnp.bfloat16
    d = head_dim

    # Hoisted once per tile (grid-invariant w.r.t. heads): additive edge bias,
    # 0 for edges and -1e30 for non-edges (shipped from HBM as bf16).
    adj_bias = adjb_ref[...].astype(f32)                           # (T, N)

    for h in range(n_heads):                                       # static unroll
        # logits, LeakyReLU, mask and softmax numerator all stay in f32
        e = er_ref[:, h:h + 1] + elt_ref[h:h + 1, :]               # (T, N)
        e = jnp.maximum(e, slope * e)                              # LeakyReLU(0.2)
        e = e + adj_bias                                           # mask non-edges
        e = e - jnp.max(e, axis=1, keepdims=True)                  # safe softmax
        p = jnp.exp(e)
        inv = pl.reciprocal(jnp.sum(p, axis=1, keepdims=True), approx=True)  # (T, 1)
        # Normalize AFTER the matmul: (T, d) scale instead of a (T, N) divide.
        zh = z_ref[:, h * d:(h + 1) * d]                           # (N, d) bf16
        gat_h = jnp.dot(p.astype(bf16), zh, preferred_element_type=f32)
        acc_ref[:, h * d:(h + 1) * d] = gat_h * inv

    h1 = x_ref[...] + acc_ref[...] + gatb_ref[...]                 # SkipConnection(GAT)
    h1 = h1 * bn1s_ref[...] + bn1b_ref[...]                        # BatchNorm1d (folded)
    t = jnp.maximum(
        jnp.dot(h1.astype(bf16), w1_ref[...], preferred_element_type=f32) + b1_ref[...],
        0.0)                                                       # Linear + ReLU
    ff = jnp.dot(t.astype(bf16), w2_ref[...], preferred_element_type=f32) + b2_ref[...]
    h2 = h1 + ff                                                   # SkipConnection(MLP)
    o_ref[...] = (h2 * bn2s_ref[...] + bn2b_ref[...]).astype(o_ref.dtype)


# ----------------------------------------------------------------------------
# Wrapper
# ----------------------------------------------------------------------------
def attention_layer_forward(x, adj_in, params, *, tile_n=256, tile_n_proj=1024,
                            eps=1e-5):
    """AttentionLayer forward.  x: (N, E) node features (f32).  adj_in: (N, N) with
    adj_in[v, u] > 0 iff edge u -> v (every node must have in-degree >= 1)."""
    N, E = x.shape
    H = int(params["n_heads"])
    d = E // H
    HFF = params["w1"].shape[1]
    assert E % H == 0
    f32, bf16 = jnp.float32, jnp.bfloat16

    tile_n = min(tile_n, N)
    tile_n_proj = min(tile_n_proj, N)
    assert N % tile_n == 0 and N % tile_n_proj == 0, "pad N to a multiple of the tiles"
    assert tile_n == N or tile_n % 16 == 0, "bf16 row tiles need a multiple of 16"
    assert tile_n_proj == N or tile_n_proj % 16 == 0

    # --- one-off host/XLA-side prep (grid-invariant) ---------------------------
    # Fused [AR | AL] block-diagonal packing: elr = z @ ALR gives er=elr[:, :H],
    # el=elr[:, H:] with a single MXU matmul / single (N, 2H) store.
    eye_h = jnp.eye(H, dtype=f32)
    ar_mat = (params["attn_r"][:, :, None] * eye_h[:, None, :]).reshape(E, H)
    al_mat = (params["attn_l"][:, :, None] * eye_h[:, None, :]).reshape(E, H)
    alr_mat = jnp.concatenate([ar_mat, al_mat], axis=1)            # (E, 2H)

    # Additive edge bias in bf16: halves the dominant N^2 HBM stream and removes
    # the per-head compare/select in the kernel.
    adj_bias = jnp.where(adj_in > 0, 0.0, -1e30).astype(bf16)      # (N, N)

    # Fold eval-mode BatchNorm into scale/shift once (not per grid step).
    s1 = params["bn1_gamma"] / jnp.sqrt(params["bn1_var"] + eps)
    bn1_scale = s1.reshape(1, E)
    bn1_shift = (params["bn1_beta"] - params["bn1_mean"] * s1).reshape(1, E)
    s2 = params["bn2_gamma"] / jnp.sqrt(params["bn2_var"] + eps)
    bn2_scale = s2.reshape(1, E)
    bn2_shift = (params["bn2_beta"] - params["bn2_mean"] * s2).reshape(1, E)

    wfc_bf = params["wfc"].astype(bf16)
    w1_bf = params["w1"].astype(bf16)
    w2_bf = params["w2"].astype(bf16)
    gat_bias = params["gat_bias"].reshape(1, E).astype(f32)
    b1 = params["b1"].reshape(1, HFF).astype(f32)
    b2 = params["b2"].reshape(1, E).astype(f32)

    # ---- Kernel 1: projection (row-tiled, weights resident) -------------------
    flops1 = 2 * N * E * E + 2 * N * E * (2 * H)
    bytes1 = 4 * N * E + 2 * E * E + 4 * E * 2 * H + 2 * N * E + 4 * N * 2 * H
    z, elr = pl.pallas_call(
        _gat_project_kernel,
        out_shape=(jax.ShapeDtypeStruct((N, E), bf16),
                   jax.ShapeDtypeStruct((N, 2 * H), f32)),
        grid_spec=pltpu.PrefetchScalarGridSpec(
            num_scalar_prefetch=0,
            grid=(N // tile_n_proj,),
            in_specs=[
                pl.BlockSpec((tile_n_proj, E), lambda i: (i, 0)),   # x tile
                pl.BlockSpec((E, E), lambda i: (0, 0)),             # Wfc bf16 (resident)
                pl.BlockSpec((E, 2 * H), lambda i: (0, 0)),         # [AR|AL] (resident)
            ],
            out_specs=(
                pl.BlockSpec((tile_n_proj, E), lambda i: (i, 0)),   # z tile (bf16)
                pl.BlockSpec((tile_n_proj, 2 * H), lambda i: (i, 0)),
            ),
        ),
        compiler_params=pltpu.CompilerParams(
            dimension_semantics=("parallel",),
            vmem_limit_bytes=32 * 1024 * 1024),
        cost_estimate=pl.CostEstimate(flops=flops1, transcendentals=0,
                                      bytes_accessed=bytes1),
    )(x, wfc_bf, alr_mat)

    er = elr[:, :H]          # destination-node logit term (row-tiled in kernel 2)
    el_t = elr[:, H:].T      # source-node logit term, lane-dense (H, N), resident

    # ---- Kernel 2: attention + skip + BN + FFN skip + BN (row-tiled) ----------
    # Resident operands (constant index_map) are DMA'd once, not per tile, so the
    # advisory byte count below counts them once on purpose.
    flops2 = 2 * N * N * E + 6 * N * N * H + 4 * N * E * HFF + 12 * N * E
    trans2 = N * N * H + N * H
    bytes2 = (4 * N * E * 2 + 2 * N * N + 4 * N * H + 2 * N * E + 4 * H * N
              + 2 * E * HFF * 2 + 4 * (6 * E + HFF))
    out = pl.pallas_call(
        functools.partial(_gat_ffn_kernel, n_heads=H, head_dim=d, slope=0.2),
        out_shape=jax.ShapeDtypeStruct((N, E), x.dtype),
        grid_spec=pltpu.PrefetchScalarGridSpec(
            num_scalar_prefetch=0,
            grid=(N // tile_n,),
            in_specs=[
                pl.BlockSpec((tile_n, E), lambda i: (i, 0)),    # x tile (residual)
                pl.BlockSpec((tile_n, N), lambda i: (i, 0)),    # adj bias rows (bf16)
                pl.BlockSpec((tile_n, H), lambda i: (i, 0)),    # er tile (dest logits)
                pl.BlockSpec((N, E), lambda i: (0, 0)),         # z bf16 (resident)
                pl.BlockSpec((H, N), lambda i: (0, 0)),         # el^T (resident)
                pl.BlockSpec((1, E), lambda i: (0, 0)),         # GAT bias
                pl.BlockSpec((1, E), lambda i: (0, 0)),         # BN1 scale
                pl.BlockSpec((1, E), lambda i: (0, 0)),         # BN1 shift
                pl.BlockSpec((E, HFF), lambda i: (0, 0)),       # W1 bf16 (resident)
                pl.BlockSpec((1, HFF), lambda i: (0, 0)),       # b1
                pl.BlockSpec((HFF, E), lambda i: (0, 0)),       # W2 bf16 (resident)
                pl.BlockSpec((1, E), lambda i: (0, 0)),         # b2
                pl.BlockSpec((1, E), lambda i: (0, 0)),         # BN2 scale
                pl.BlockSpec((1, E), lambda i: (0, 0)),         # BN2 shift
            ],
            out_specs=pl.BlockSpec((tile_n, E), lambda i: (i, 0)),  # lane-dense out
            scratch_shapes=[pltpu.VMEM((tile_n, E), f32)],          # head accumulator
        ),
        compiler_params=pltpu.CompilerParams(
            dimension_semantics=("parallel",),
            vmem_limit_bytes=48 * 1024 * 1024),
        cost_estimate=pl.CostEstimate(flops=flops2, transcendentals=trans2,
                                      bytes_accessed=bytes2),
    )(x, adj_bias, er, z, el_t, gat_bias, bn1_scale, bn1_shift,
      w1_bf, b1, w2_bf, b2, bn2_scale, bn2_shift)
    return out


# ----------------------------------------------------------------------------
# Pure-JAX reference (same math, for correctness checking)
# ----------------------------------------------------------------------------
def attention_layer_reference(x, adj_in, params, eps=1e-5):
    N, E = x.shape
    H = int(params["n_heads"])
    d = E // H
    z = x @ params["wfc"]
    zh = z.reshape(N, H, d)
    el = (zh * params["attn_l"][None]).sum(-1)            # (N, H) source term
    er = (zh * params["attn_r"][None]).sum(-1)            # (N, H) dest term
    e = er[:, None, :] + el[None, :, :]                   # e[v, u, h]
    e = jnp.where(e > 0, e, 0.2 * e)                      # LeakyReLU
    e = jnp.where(adj_in[:, :, None] > 0, e, -1e30)
    alpha = jax.nn.softmax(e, axis=1)                     # softmax over sources u
    gat = jnp.einsum('vuh,uhd->vhd', alpha, zh).reshape(N, E) + params["gat_bias"]
    h1 = x + gat                                          # SkipConnection(GATConv)
    s1 = params["bn1_gamma"] / jnp.sqrt(params["bn1_var"] + eps)
    h1 = (h1 - params["bn1_mean"]) * s1 + params["bn1_beta"]
    ff = jnp.maximum(h1 @ params["w1"] + params["b1"], 0.0) @ params["w2"] + params["b2"]
    h2 = h1 + ff                                          # SkipConnection(MLP)
    s2 = params["bn2_gamma"] / jnp.sqrt(params["bn2_var"] + eps)
    return (h2 - params["bn2_mean"]) * s2 + params["bn2_beta"]


if __name__ == "__main__":
    key = jax.random.PRNGKey(0)
    (k_x, k_adj, k_wfc, k_al, k_ar, k_gb, k_w1, k_b1, k_w2, k_b2,
     k_g1, k_be1, k_m1, k_v1, k_g2, k_be2, k_m2, k_v2) = jax.random.split(key, 18)

    # Small shapes consistent with the module: N nodes, embed_dim, n_heads, hidden_dim.
    N, E, H, HFF = 64, 128, 8, 512
    d = E // H

    x = jax.random.normal(k_x, (N, E), dtype=jnp.float32)
    # Random directed graph with self-loops (=> in-degree >= 1, as DGL requires).
    adj_in = jnp.maximum(
        (jax.random.uniform(k_adj, (N, N)) < 0.3).astype(jnp.float32),
        jnp.eye(N, dtype=jnp.float32))
    assert bool(jnp.all(adj_in.sum(axis=1) > 0)), "every node needs in-degree >= 1"

    params = dict(
        n_heads=H,
        wfc=jax.random.normal(k_wfc, (E, E), jnp.float32) / jnp.sqrt(E),
        attn_l=jax.random.normal(k_al, (H, d), jnp.float32) * 0.2,
        attn_r=jax.random.normal(k_ar, (H, d), jnp.float32) * 0.2,
        gat_bias=jax.random.normal(k_gb, (E,), jnp.float32) * 0.1,
        w1=jax.random.normal(k_w1, (E, HFF), jnp.float32) / jnp.sqrt(E),
        b1=jax.random.normal(k_b1, (HFF,), jnp.float32) * 0.1,
        w2=jax.random.normal(k_w2, (HFF, E), jnp.float32) / jnp.sqrt(HFF),
        b2=jax.random.normal(k_b2, (E,), jnp.float32) * 0.1,
        bn1_gamma=1.0 + 0.1 * jax.random.normal(k_g1, (E,), jnp.float32),
        bn1_beta=0.1 * jax.random.normal(k_be1, (E,), jnp.float32),
        bn1_mean=0.1 * jax.random.normal(k_m1, (E,), jnp.float32),
        bn1_var=jax.random.uniform(k_v1, (E,), jnp.float32, 0.5, 1.5),
        bn2_gamma=1.0 + 0.1 * jax.random.normal(k_g2, (E,), jnp.float32),
        bn2_beta=0.1 * jax.random.normal(k_be2, (E,), jnp.float32),
        bn2_mean=0.1 * jax.random.normal(k_m2, (E,), jnp.float32),
        bn2_var=jax.random.uniform(k_v2, (E,), jnp.float32, 0.5, 1.5),
    )

    # tile_n=32 -> 2 row tiles at this toy size; use 256-512 for real node counts.
    out = attention_layer_forward(x, adj_in, params, tile_n=32, tile_n_proj=64)
    jax.block_until_ready(out)

    ref = attention_layer_reference(x, adj_in, params)
    assert out.shape == (N, E)
    max_err = float(jnp.max(jnp.abs(out - ref)))
    scale = float(jnp.max(jnp.abs(ref)))
    # bf16 MXU operands + approximate reciprocal => relative tolerance, not 1e-3.
    assert max_err <= 0.02 * scale + 0.05, (
        f"mismatch vs reference: max abs err = {max_err}, ref scale = {scale}")
    print("KERNEL_OK")
</pallas_src>

<mosaic_0001>
module attributes {stable_mosaic.version = 11 : i64} {
  func.func @_gat_project_kernel(%arg0: i32, %arg1: memref<64x128xf32, #tpu.memory_space<vmem>>, %arg2: memref<128x128xbf16, #tpu.memory_space<vmem>>, %arg3: memref<128x16xf32, #tpu.memory_space<vmem>>, %arg4: memref<64x128xbf16, #tpu.memory_space<vmem>>, %arg5: memref<64x16xf32, #tpu.memory_space<vmem>>) attributes {dimension_semantics = [#tpu.dimension_semantics<parallel>], iteration_bounds = array<i64: 1>, scalar_prefetch = 0 : i64, scratch_operands = 0 : i64, tpu.core_type = #tpu.core_type<tc>, window_params = [{transform_indices = @transform_0, window_bounds = array<i64: 64, 128>}, {pipeline_mode = #tpu.pipeline_mode<synchronous>, transform_indices = @transform_1, window_bounds = array<i64: 128, 128>}, {pipeline_mode = #tpu.pipeline_mode<synchronous>, transform_indices = @transform_2, window_bounds = array<i64: 128, 16>}, {transform_indices = @transform_3, window_bounds = array<i64: 64, 128>}, {transform_indices = @transform_4, window_bounds = array<i64: 64, 16>}]} {
    %c0 = arith.constant 0 : index
    %c0_0 = arith.constant 0 : index
    %0 = vector.load %arg1[%c0, %c0_0] : memref<64x128xf32, #tpu.memory_space<vmem>>, vector<64x128xf32>
    %1 = arith.truncf %0 : vector<64x128xf32> to vector<64x128xbf16>
    %c0_1 = arith.constant 0 : index
    %c0_2 = arith.constant 0 : index
    %2 = vector.load %arg2[%c0_1, %c0_2] : memref<128x128xbf16, #tpu.memory_space<vmem>>, vector<128x128xbf16>
    %cst = arith.constant dense<0.000000e+00> : vector<64x128xf32>
    %3 = tpu.matmul %1, %2, %cst {dimension_numbers = #tpu.dot_dimension_numbers<[1], [0], [0], [1], [0, 0, 1, 1], [], []>} : vector<64x128xbf16>, vector<128x128xbf16>, vector<64x128xf32> -> vector<64x128xf32>
    %4 = arith.truncf %3 : vector<64x128xf32> to vector<64x128xbf16>
    %c0_3 = arith.constant 0 : index
    %c0_4 = arith.constant 0 : index
    %5 = vector.load %arg4[%c0_3, %c0_4] : memref<64x128xbf16, #tpu.memory_space<vmem>>, vector<64x128xbf16>
    tpu.vector_store %arg4[%c0_3, %c0_4], %4 {strides = array<i32>} : memref<64x128xbf16, #tpu.memory_space<vmem>>, vector<64x128xbf16>,
    %c0_5 = arith.constant 0 : index
    %c0_6 = arith.constant 0 : index
    %6 = vector.load %arg3[%c0_5, %c0_6] : memref<128x16xf32, #tpu.memory_space<vmem>>, vector<128x16xf32>
    %cst_7 = arith.constant dense<0.000000e+00> : vector<64x16xf32>
    %7 = tpu.matmul %3, %6, %cst_7 {dimension_numbers = #tpu.dot_dimension_numbers<[1], [0], [0], [1], [0, 0, 1, 1], [], []>} : vector<64x128xf32>, vector<128x16xf32>, vector<64x16xf32> -> vector<64x16xf32>
    %c0_8 = arith.constant 0 : index
    %c0_9 = arith.constant 0 : index
    %8 = vector.load %arg5[%c0_8, %c0_9] : memref<64x16xf32, #tpu.memory_space<vmem>>, vector<64x16xf32>
    tpu.vector_store %arg5[%c0_8, %c0_9], %7 {strides = array<i32>} : memref<64x16xf32, #tpu.memory_space<vmem>>, vector<64x16xf32>,
    return
  }
  func.func @transform_0(%arg0: i32) -> (i32, i32) {
    %c0_i32 = arith.constant 0 : i32
    %c0_i32_0 = arith.constant 0 : i32
    return %arg0, %c0_i32 : i32, i32
  }
  func.func @transform_1(%arg0: i32) -> (i32, i32) {
    %c0_i32 = arith.constant 0 : i32
    %c0_i32_0 = arith.constant 0 : i32
    %c0_i32_1 = arith.constant 0 : i32
    return %c0_i32, %c0_i32_0 : i32, i32
  }
  func.func @transform_2(%arg0: i32) -> (i32, i32) {
    %c0_i32 = arith.constant 0 : i32
    %c0_i32_0 = arith.constant 0 : i32
    %c0_i32_1 = arith.constant 0 : i32
    return %c0_i32, %c0_i32_0 : i32, i32
  }
  func.func @transform_3(%arg0: i32) -> (i32, i32) {
    %c0_i32 = arith.constant 0 : i32
    %c0_i32_0 = arith.constant 0 : i32
    return %arg0, %c0_i32 : i32, i32
  }
  func.func @transform_4(%arg0: i32) -> (i32, i32) {
    %c0_i32 = arith.constant 0 : i32
    %c0_i32_0 = arith.constant 0 : i32
    return %arg0, %c0_i32 : i32, i32
  }
}

</mosaic_0001>

<llo_original>
// kernel: tpu_custom_call.1
$region0: #{tpu_custom_call.1}
  #allocation0 [shape = 'u32[]', space=smem, size = 0x4, offset = 0x4, fixed_abs, tag = 'smem constant byte address 0x4 - core index']
  #allocation1 [shape = 'u32[144,128]{1,0:T(1,128)}', space=vmem, size = 0x12000, scoped, tag = 'internal scratch']
  %s0 = inlined_call_operand.vmem [shape: f32[64,128], index: 0, kind: input, shape index: {}]
  %s1 = inlined_call_operand.vmem [shape: bf16[128,128], index: 1, kind: input, shape index: {}]
  %s2 = inlined_call_operand.vmem [shape: f32[128,16], index: 2, kind: input, shape index: {}]
  %s3 = inlined_call_operand.hbm [shape: bf16[64,128], index: 3, kind: output, shape index: {0}]
  %s4 = inlined_call_operand.vmem [shape: f32[64,16], index: 4, kind: output, shape index: {1}]
  %5 = xla_tuple %s3, %s4
  %s6 = sld [smem:[#allocation0]]
  $region30: #{tpu_custom_call.1} parent=0
    _
  %s8 = ssub.s32 1, %s6
  %s9 = scalar_select 0, %s8, %s6
  $region1: #{tpu_custom_call.1} parent=0
    #allocation2 [shape = 'u8[16384]{0}', space=vmem, size = 0x4000, scoped, tag = 'output window, operand 0, single buffered']
    #allocation3 [shape = 's32[1]{0}', space=sflag, size = 0x4, scoped, tag = 'scoped memory for tpu_custom_call.1']
    %10 = vsyncpa [#allocation3], 0
    // Predicated region
    $region2: #{tpu_custom_call.1} parent=1 // pred_check
      _
    $region3: #{tpu_custom_call.1} parent=1 // pred_check_branch
      %12 = sbr.rel (0) target = $region5
    $region4: #{tpu_custom_call.1} parent=1 // pred_region
      _
    $region5: #{tpu_custom_call.1} parent=1 // pred_fallthru
      _
    // Predicated region
    $region6: #{tpu_custom_call.1} parent=1 // pred_check
      _
    $region7: #{tpu_custom_call.1} parent=1 // pred_check_branch
      %14 = sbr.rel (0) target = $region9
    $region8: #{tpu_custom_call.1} parent=1 // pred_region
      _
    $region9: #{tpu_custom_call.1} parent=1 // pred_fallthru
      _
    // Predicated region
    $region10: #{tpu_custom_call.1} parent=1 // pred_check
      _
    $region11: #{tpu_custom_call.1} parent=1 // pred_check_branch
      %16 = sbr.rel (0) target = $region13
    $region12: #{tpu_custom_call.1} parent=1 // pred_region
      _
    $region13: #{tpu_custom_call.1} parent=1 // pred_fallthru
      _
    %v18 = vld [vmem:[%s0] sm:$0xff]
    %v19 = vld [vmem:[%s0 + $0x8] sm:$0xff]
    %v20 = vld [vmem:[%s0 + $0x10] sm:$0xff]
    %v21 = vld [vmem:[%s0 + $0x18] sm:$0xff]
    %v22 = vld [vmem:[%s0 + $0x20] sm:$0xff]
    %v23 = vld [vmem:[%s0 + $0x28] sm:$0xff]
    %v24 = vld [vmem:[%s0 + $0x30] sm:$0xff]
    %v25 = vld [vmem:[%s0 + $0x38] sm:$0xff]
    %v26 = vpack.c.bf16 %v19, %v18
    %v27 = vpack.c.bf16 %v21, %v20
    %v28 = vpack.c.bf16 %v23, %v22
    %v29 = vpack.c.bf16 %v25, %v24
    %v30 = vld [vmem:[%s1] sm:$0xf]
    %v31 = vld [vmem:[%s1 + $0x4] sm:$0xf]
    %v32 = vld [vmem:[%s1 + $0x8] sm:$0xf]
    %v33 = vld [vmem:[%s1 + $0xc] sm:$0xf]
    %v34 = vld [vmem:[%s1 + $0x10] sm:$0xf]
    %v35 = vld [vmem:[%s1 + $0x14] sm:$0xf]
    %v36 = vld [vmem:[%s1 + $0x18] sm:$0xf]
    %v37 = vld [vmem:[%s1 + $0x1c] sm:$0xf]
    %v38 = vld [vmem:[%s1 + $0x20] sm:$0xf]
    %v39 = vld [vmem:[%s1 + $0x24] sm:$0xf]
    %v40 = vld [vmem:[%s1 + $0x28] sm:$0xf]
    %v41 = vld [vmem:[%s1 + $0x2c] sm:$0xf]
    %v42 = vld [vmem:[%s1 + $0x30] sm:$0xf]
    %v43 = vld [vmem:[%s1 + $0x34] sm:$0xf]
    %v44 = vld [vmem:[%s1 + $0x38] sm:$0xf]
    %v45 = vld [vmem:[%s1 + $0x3c] sm:$0xf]
    %v62 = vunpack.c.l.b16 %v30
    %v63 = vunpack.c.l.b16 %v31
    %v64 = vunpack.c.l.b16 %v32
    %v65 = vunpack.c.l.b16 %v33
    %v66 = vunpack.c.l.b16 %v34
    %v67 = vunpack.c.l.b16 %v35
    %v68 = vunpack.c.l.b16 %v36
    %v69 = vunpack.c.l.b16 %v37
    %v70 = vunpack.c.l.b16 %v38
    %v71 = vunpack.c.l.b16 %v39
    %v72 = vunpack.c.l.b16 %v40
    %v73 = vunpack.c.l.b16 %v41
    %v74 = vunpack.c.l.b16 %v42
    %v75 = vunpack.c.l.b16 %v43
    %v76 = vunpack.c.l.b16 %v44
    %v77 = vunpack.c.l.b16 %v45
    %v78 = vpack.c.b16 %v63, %v62
    %v79 = vpack.c.b16 %v65, %v64
    %v80 = vpack.c.b16 %v67, %v66
    %v81 = vpack.c.b16 %v69, %v68
    %v82 = vpack.c.b16 %v71, %v70
    %v83 = vpack.c.b16 %v73, %v72
    %v84 = vpack.c.b16 %v75, %v74
    %v85 = vpack.c.b16 %v77, %v76
    %94 = vmatprep.subr.bf16.mxu0 0
    %95 = vmatpush1.bf16.msra.mxu0 %v78
    %96 = vmatprep.subr.bf16.mxu0 0
    %97 = vmatpush1.bf16.msra.mxu0 %v79
    %98 = vmatprep.subr.bf16.mxu0 0
    %99 = vmatpush1.bf16.msra.mxu0 %v80
    %100 = vmatprep.subr.bf16.mxu0 0
    %101 = vmatpush1.bf16.msra.mxu0 %v81
    %102 = vmatprep.subr.bf16.mxu0 0
    %103 = vmatpush1.bf16.msra.mxu0 %v82
    %104 = vmatprep.subr.bf16.mxu0 0
    %105 = vmatpush1.bf16.msra.mxu0 %v83
    %106 = vmatprep.subr.bf16.mxu0 0
    %107 = vmatpush1.bf16.msra.mxu0 %v84
    %108 = vmatprep.subr.bf16.mxu0 0
    %109 = vmatpush1.bf16.msra.mxu0 %v85
    %110 = vmatprep.subr.bf16.mxu0 0
    %111 = vmatpush1.bf16.msra.mxu0 0
    %112 = vmatprep.subr.bf16.mxu0 0
    %113 = vmatpush1.bf16.msra.mxu0 0
    %114 = vmatprep.subr.bf16.mxu0 0
    %115 = vmatpush1.bf16.msra.mxu0 0
    %116 = vmatprep.subr.bf16.mxu0 0
    %117 = vmatpush1.bf16.msra.mxu0 0
    %118 = vmatprep.subr.bf16.mxu0 0
    %119 = vmatpush1.bf16.msra.mxu0 0
    %120 = vmatprep.subr.bf16.mxu0 0
    %121 = vmatpush1.bf16.msra.mxu0 0
    %122 = vmatprep.subr.bf16.mxu0 0
    %123 = vmatpush1.bf16.msra.mxu0 0
    %124 = vmatprep.subr.bf16.mxu0 0
    %125 = vmatpush1.bf16.msra.mxu0 0
    %126 = vmatprep.mubr.bf16.mxu0 0
    %127 = vmatmul.mubr.bf16.gmra.mrb[0].mxu0 %v26
    %v128 = vpop.f32.mrb[0].mxu0
    %v129 = vadd.f32 0.0, %v128
    %v130 = vpop.f32.mrb[0].mxu0
    %v131 = vpop.f32.mrb[0].mxu0
    %v132 = vadd.f32 0.0, %v131
    %v133 = vpop.f32.mrb[0].mxu0
    %134 = vmatprep.mubr.bf16.mxu0 0
    %135 = vmatmul.mubr.bf16.gmra.mrb[0].mxu0 %v27
    %v136 = vpop.f32.mrb[0].mxu0
    %v137 = vadd.f32 0.0, %v136
    %v138 = vpop.f32.mrb[0].mxu0
    %v139 = vpop.f32.mrb[0].mxu0
    %v140 = vadd.f32 0.0, %v139
    %v141 = vpop.f32.mrb[0].mxu0
    %142 = vmatprep.mubr.bf16.mxu0 0
    %143 = vmatmul.mubr.bf16.gmra.mrb[0].mxu0 %v28
    %v144 = vpop.f32.mrb[0].mxu0
    %v145 = vadd.f32 0.0, %v144
    %v146 = vpop.f32.mrb[0].mxu0
    %v147 = vpop.f32.mrb[0].mxu0
    %v148 = vadd.f32 0.0, %v147
    %v149 = vpop.f32.mrb[0].mxu0
    %150 = vmatprep.mubr.bf16.mxu0 0
    %151 = vmatmul.mubr.bf16.gmra.mrb[0].mxu0 %v29
    %v152 = vpop.f32.mrb[0].mxu0
    %v153 = vadd.f32 0.0, %v152
    %v154 = vpop.f32.mrb[0].mxu0
    %v155 = vpop.f32.mrb[0].mxu0
    %v156 = vadd.f32 0.0, %v155
    %v157 = vpop.f32.mrb[0].mxu0
    %158 = vdwg.mxu0
    %v159 = vpack.c.bf16 %v132, %v129
    %v160 = vpack.c.bf16 %v140, %v137
    %v161 = vpack.c.bf16 %v148, %v145
    %v162 = vpack.c.bf16 %v156, %v153
    %v167 = vunpack.c.l.b16 %v159
    %v168 = vunpack.c.h.b16 %v159
    %v169 = vunpack.c.l.b16 %v160
    %v170 = vunpack.c.h.b16 %v160
    %v171 = vunpack.c.l.b16 %v161
    %v172 = vunpack.c.h.b16 %v161
    %v173 = vunpack.c.l.b16 %v162
    %v174 = vunpack.c.h.b16 %v162
    %v175 = vpack.c.b16 %v167, %v167
    %v176 = vpack.c.b16 %v168, %v168
    %v177 = vpack.c.b16 %v169, %v169
    %v178 = vpack.c.b16 %v170, %v170
    %v179 = vpack.c.b16 %v171, %v171
    %v180 = vpack.c.b16 %v172, %v172
    %v181 = vpack.c.b16 %v173, %v173
    %v182 = vpack.c.b16 %v174, %v174
    %191 = vst [vmem:[#allocation2] sm:$0xf] %v175
    %192 = vst [vmem:[#allocation2 + $0x4] sm:$0xf] %v176
    %193 = vst [vmem:[#allocation2 + $0x8] sm:$0xf] %v177
    %194 = vst [vmem:[#allocation2 + $0xc] sm:$0xf] %v178
    %195 = vst [vmem:[#allocation2 + $0x10] sm:$0xf] %v179
    %196 = vst [vmem:[#allocation2 + $0x14] sm:$0xf] %v180
    %197 = vst [vmem:[#allocation2 + $0x18] sm:$0xf] %v181
    %198 = vst [vmem:[#allocation2 + $0x1c] sm:$0xf] %v182
    %v199 = vld [vmem:[%s2] sm:$0xff]
    %v200 = vld [vmem:[%s2 + $0x8] sm:$0xff]
    %v201 = vld [vmem:[%s2 + $0x10] sm:$0xff]
    %v202 = vld [vmem:[%s2 + $0x18] sm:$0xff]
    %v203 = vld [vmem:[%s2 + $0x20] sm:$0xff]
    %v204 = vld [vmem:[%s2 + $0x28] sm:$0xff]
    %v205 = vld [vmem:[%s2 + $0x30] sm:$0xff]
    %v206 = vld [vmem:[%s2 + $0x38] sm:$0xff]
    %v207 = vld [vmem:[%s2 + $0x40] sm:$0xff]
    %v208 = vld [vmem:[%s2 + $0x48] sm:$0xff]
    %v209 = vld [vmem:[%s2 + $0x50] sm:$0xff]
    %v210 = vld [vmem:[%s2 + $0x58] sm:$0xff]
    %v211 = vld [vmem:[%s2 + $0x60] sm:$0xff]
    %v212 = vld [vmem:[%s2 + $0x68] sm:$0xff]
    %v213 = vld [vmem:[%s2 + $0x70] sm:$0xff]
    %v214 = vld [vmem:[%s2 + $0x78] sm:$0xff]
    %215 = vmatprep.subr.mxu0 0.0
    %216 = vmatpush1.msra.mxu0 %v199
    %217 = vmatprep.subr.mxu0 0.0
    %218 = vmatpush1.msra.mxu0 %v200
    %219 = vmatprep.subr.mxu0 0.0
    %220 = vmatpush1.msra.mxu0 %v201
    %221 = vmatprep.subr.mxu0 0.0
    %222 = vmatpush1.msra.mxu0 %v202
    %223 = vmatprep.subr.mxu0 0.0
    %224 = vmatpush1.msra.mxu0 %v203
    %225 = vmatprep.subr.mxu0 0.0
    %226 = vmatpush1.msra.mxu0 %v204
    %227 = vmatprep.subr.mxu0 0.0
    %228 = vmatpush1.msra.mxu0 %v205
    %229 = vmatprep.subr.mxu0 0.0
    %230 = vmatpush1.msra.mxu0 %v206
    %231 = vmatprep.subr.mxu0 0.0
    %232 = vmatpush1.msra.mxu0 %v207
    %233 = vmatprep.subr.mxu0 0.0
    %234 = vmatpush1.msra.mxu0 %v208
    %235 = vmatprep.subr.mxu0 0.0
    %236 = vmatpush1.msra.mxu0 %v209
    %237 = vmatprep.subr.mxu0 0.0
    %238 = vmatpush1.msra.mxu0 %v210
    %239 = vmatprep.subr.mxu0 0.0
    %240 = vmatpush1.msra.mxu0 %v211
    %241 = vmatprep.subr.mxu0 0.0
    %242 = vmatpush1.msra.mxu0 %v212
    %243 = vmatprep.subr.mxu0 0.0
    %244 = vmatpush1.msra.mxu0 %v213
    %245 = vmatprep.subr.mxu0 0.0
    %246 = vmatpush1.msra.mxu0 %v214
    %247 = vmatprep.subr.mxu0 0.0
    %248 = vmatpush1.msra.mxu0 0.0
    %249 = vmatprep.subr.mxu0 0.0
    %250 = vmatpush1.msra.mxu0 0.0
    %251 = vmatprep.subr.mxu0 0.0
    %252 = vmatpush1.msra.mxu0 0.0
    %253 = vmatprep.subr.mxu0 0.0
    %254 = vmatpush1.msra.mxu0 0.0
    %255 = vmatprep.subr.mxu0 0.0
    %256 = vmatpush1.msra.mxu0 0.0
    %257 = vmatprep.subr.mxu0 0.0
    %258 = vmatpush1.msra.mxu0 0.0
    %259 = vmatprep.subr.mxu0 0.0
    %260 = vmatpush1.msra.mxu0 0.0
    %261 = vmatprep.subr.mxu0 0.0
    %262 = vmatpush1.msra.mxu0 0.0
    %263 = vmatprep.subr.mxu0 0.0
    %264 = vmatpush1.msra.mxu0 0.0
    %265 = vmatprep.subr.mxu0 0.0
    %266 = vmatpush1.msra.mxu0 0.0
    %267 = vmatprep.subr.mxu0 0.0
    %268 = vmatpush1.msra.mxu0 0.0
    %269 = vmatprep.subr.mxu0 0.0
    %270 = vmatpush1.msra.mxu0 0.0
    %271 = vmatprep.subr.mxu0 0.0
    %272 = vmatpush1.msra.mxu0 0.0
    %273 = vmatprep.subr.mxu0 0.0
    %274 = vmatpush1.msra.mxu0 0.0
    %275 = vmatprep.subr.mxu0 0.0
    %276 = vmatpush1.msra.mxu0 0.0
    %277 = vmatprep.subr.mxu0 0.0
    %278 = vmatpush1.msra.mxu0 0.0
    %279 = vmatprep.mubr.f32.mxu0 0.0
    %280 = vmatmul.mubr.f32.gmra.mrb[0].mxu0 %v129
    %v281 = vpop.f32.mrb[0].mxu0
    %v282 = vadd.f32 0.0, %v281
    %v283 = vpop.f32.mrb[0].mxu0
    %284 = vmatprep.mubr.f32.mxu0 0.0
    %285 = vmatmul.mubr.f32.gmra.mrb[0].mxu0 %v132
    %v286 = vpop.f32.mrb[0].mxu0
    %v287 = vadd.f32 0.0, %v286
    %v288 = vpop.f32.mrb[0].mxu0
    %289 = vmatprep.mubr.f32.mxu0 0.0
    %290 = vmatmul.mubr.f32.gmra.mrb[0].mxu0 %v137
    %v291 = vpop.f32.mrb[0].mxu0
    %v292 = vadd.f32 0.0, %v291
    %v293 = vpop.f32.mrb[0].mxu0
    %294 = vmatprep.mubr.f32.mxu0 0.0
    %295 = vmatmul.mubr.f32.gmra.mrb[0].mxu0 %v140
    %v296 = vpop.f32.mrb[0].mxu0
    %v297 = vadd.f32 0.0, %v296
    %v298 = vpop.f32.mrb[0].mxu0
    %299 = vmatprep.mubr.f32.mxu0 0.0
    %300 = vmatmul.mubr.f32.gmra.mrb[0].mxu0 %v145
    %v301 = vpop.f32.mrb[0].mxu0
    %v302 = vadd.f32 0.0, %v301
    %v303 = vpop.f32.mrb[0].mxu0
    %304 = vmatprep.mubr.f32.mxu0 0.0
    %305 = vmatmul.mubr.f32.gmra.mrb[0].mxu0 %v148
    %v306 = vpop.f32.mrb[0].mxu0
    %v307 = vadd.f32 0.0, %v306
    %v308 = vpop.f32.mrb[0].mxu0
    %309 = vmatprep.mubr.f32.mxu0 0.0
    %310 = vmatmul.mubr.f32.gmra.mrb[0].mxu0 %v153
    %v311 = vpop.f32.mrb[0].mxu0
    %v312 = vadd.f32 0.0, %v311
    %v313 = vpop.f32.mrb[0].mxu0
    %314 = vmatprep.mubr.f32.mxu0 0.0
    %315 = vmatmul.mubr.f32.gmra.mrb[0].mxu0 %v156
    %v316 = vpop.f32.mrb[0].mxu0
    %v317 = vadd.f32 0.0, %v316
    %v318 = vpop.f32.mrb[0].mxu0
    %319 = vdwg.mxu0
    %vm320 = vcmask 130048
    %321 = vst.msk [vmem:[%s4] sm:$0xff] %vm320, %v282
    %322 = vst.msk [vmem:[%s4 + $0x8] sm:$0xff] %vm320, %v287
    %323 = vst.msk [vmem:[%s4 + $0x10] sm:$0xff] %vm320, %v292
    %324 = vst.msk [vmem:[%s4 + $0x18] sm:$0xff] %vm320, %v297
    %325 = vst.msk [vmem:[%s4 + $0x20] sm:$0xff] %vm320, %v302
    %326 = vst.msk [vmem:[%s4 + $0x28] sm:$0xff] %vm320, %v307
    %327 = vst.msk [vmem:[%s4 + $0x30] sm:$0xff] %vm320, %v312
    %328 = vst.msk [vmem:[%s4 + $0x38] sm:$0xff] %vm320, %v317
    // Predicated region
    $region14: #{tpu_custom_call.1} parent=1 // pred_check
      _
    $region15: #{tpu_custom_call.1} parent=1 // pred_check_branch
      %330 = sbr.rel (0) target = $region17
    $region16: #{tpu_custom_call.1} parent=1 // pred_region
      %s332 = ssub.s32 512, 512
      %333 = vsyncadd [#allocation3], %s332
      %s334 = sshll.u32 [#allocation2], 4
      %s335 = int_to_ptr.vmem [resolvable:$true] %s334
      %340 = dma.vmem_to_hbm [thread:$0]  %s335, 512, %s3, [#allocation3], 64, 64, 4
    $region17: #{tpu_custom_call.1} parent=1 // pred_fallthru
      _
    // Predicated region
    $region18: #{tpu_custom_call.1} parent=1 // pred_check
      _
    $region19: #{tpu_custom_call.1} parent=1 // pred_check_branch
      %342 = sbr.rel (0) target = $region21
    $region20: #{tpu_custom_call.1} parent=1 // pred_region
      _
    $region21: #{tpu_custom_call.1} parent=1 // pred_fallthru
      _
    // Predicated region
    $region22: #{tpu_custom_call.1} parent=1 // pred_check
      _
    $region23: #{tpu_custom_call.1} parent=1 // pred_check_branch
      %344 = sbr.rel (0) target = $region25
    $region24: #{tpu_custom_call.1} parent=1 // pred_region
      %345 = dma.done [#allocation3], 512
    $region25: #{tpu_custom_call.1} parent=1 // pred_fallthru
      _
    // Predicated region
    $region26: #{tpu_custom_call.1} parent=1 // pred_check
      _
    $region27: #{tpu_custom_call.1} parent=1 // pred_check_branch
      %347 = sbr.rel (0) target = $region29
    $region28: #{tpu_custom_call.1} parent=1 // pred_region
      _
    $region29: #{tpu_custom_call.1} parent=1 // pred_fallthru
      _
    %348 = vsyncpa [#allocation3], 1

</llo_original>
